<compile_context>
chip_gen: v7x
topology: tpu7x:2x2x1
jax: 0.10.0
libtpu: 0.0.40
codegen_flags: <defaults>
</compile_context>

<pallas_src>
import functools

import jax
import jax.numpy as jnp
from jax.experimental import pallas as pl
from jax.experimental.pallas import tpu as pltpu


def _round_up(x, m):
    return (x + m - 1) // m * m


def _vmem_capacity_bytes():
    try:
        return int(pltpu.get_tpu_info().vmem_capacity_bytes)
    except Exception:
        return 64 * 1024 * 1024  # conservative fallback (v7x per-TensorCore VMEM)


def _ce_partial_kernel(logits_ref, targets_ref, out_ref, m_ref, l_ref, t_ref, *, B, C):
    """Online-LSE cross-entropy; one partial-sum block per batch tile."""
    i = pl.program_id(0)          # batch-tile index ("parallel")
    j = pl.program_id(1)          # class-chunk index ("arbitrary" / reduction)
    nc = pl.num_programs(1)

    tile_b = m_ref.shape[0]
    tile_c = logits_ref.shape[1]

    @pl.when(j == 0)
    def _():
        m_ref[...] = jnp.full_like(m_ref, -jnp.inf)
        l_ref[...] = jnp.zeros_like(l_ref)
        t_ref[...] = jnp.zeros_like(t_ref)

    x_raw = logits_ref[...].astype(jnp.float32)          # (tb, tc)
    tgt = targets_ref[...]                               # (tb, 1) int32

    # Global class id of each lane in this chunk: (1, tc), broadcast against
    # (tb, 1) targets -- avoids a (tb, tc) int32 temporary.
    col_ids = jax.lax.broadcasted_iota(jnp.int32, (1, tile_c), 1) + j * tile_c
    col_valid = col_ids < C
    x = jnp.where(col_valid, x_raw, -jnp.inf)            # mask C-tail padding

    # Streaming (online) log-sum-exp update.
    m_prev = m_ref[...]
    m_new = jnp.maximum(m_prev, jnp.max(x, axis=-1, keepdims=True))
    l_ref[...] = (l_ref[...] * jnp.exp(m_prev - m_new)
                  + jnp.sum(jnp.exp(x - m_new), axis=-1, keepdims=True))
    m_ref[...] = m_new

    # Gather logits[b, targets[b]] -- the target class lands in exactly one chunk.
    t_ref[...] += jnp.sum(jnp.where(col_ids == tgt, x_raw, 0.0),
                          axis=-1, keepdims=True)

    @pl.when(j == nc - 1)
    def _():
        lse = m_ref[...] + jnp.log(l_ref[...])           # (tb, 1)
        per_row = lse - t_ref[...]
        row_ids = i * tile_b + jax.lax.broadcasted_iota(jnp.int32, (tile_b, 1), 0)
        per_row = jnp.where(row_ids < B, per_row, 0.0)   # mask B-tail padding
        partial = jnp.sum(per_row)
        # Lane-dense (1,8,128) block per batch tile; wrapper reads [:,0,0].
        out_ref[...] = jnp.full(out_ref.shape, partial, dtype=out_ref.dtype)


def softmax_loss_second_part(logits, targets, *, max_tile_c=2048, max_tile_b=1024):
    """JAX/Pallas equivalent of SoftMaxLossSecondPart.forward (debug=False)."""
    B, C = logits.shape
    targets_2d = targets.reshape(B, 1).astype(jnp.int32)
    in_bytes = jnp.dtype(logits.dtype).itemsize

    # ---- class chunking: full C if small, else multiple-of-128 chunks -------
    tile_c = C if C <= max_tile_c else max_tile_c        # tail chunk masked in-kernel

    # ---- batch tile sized from VMEM capacity (HBM-roofline: go big) ---------
    cap = _vmem_capacity_bytes()
    vmem_limit = min(cap, 128 * 1024 * 1024) - (8 * 1024 * 1024)  # headroom
    budget = vmem_limit // 2                             # budget for logits tiles+temps
    # per row of one chunk: 2x double-buffered input + ~4 f32 elementwise temps
    bytes_per_row = tile_c * (2 * in_bytes + 4 * 4)
    tile_b = max(8, min(max_tile_b, (budget // bytes_per_row) // 8 * 8))
    tile_b = min(tile_b, _round_up(B, 8))

    nb = pl.cdiv(B, tile_b)
    nc = pl.cdiv(C, tile_c)

    out = pl.pallas_call(
        functools.partial(_ce_partial_kernel, B=B, C=C),
        out_shape=jax.ShapeDtypeStruct((nb, 8, 128), jnp.float32),
        grid_spec=pltpu.PrefetchScalarGridSpec(
            num_scalar_prefetch=0,
            grid=(nb, nc),
            in_specs=[
                pl.BlockSpec((tile_b, tile_c), lambda i, j: (i, j)),   # logits
                pl.BlockSpec((tile_b, 1), lambda i, j: (i, 0)),        # targets
            ],
            out_specs=pl.BlockSpec((1, 8, 128), lambda i, j: (i, 0, 0)),
            scratch_shapes=[
                pltpu.VMEM((tile_b, 1), jnp.float32),   # running max  m
                pltpu.VMEM((tile_b, 1), jnp.float32),   # running sum  l
                pltpu.VMEM((tile_b, 1), jnp.float32),   # target logit t
            ],
        ),
        compiler_params=pltpu.CompilerParams(
            dimension_semantics=("parallel", "arbitrary"),
            vmem_limit_bytes=int(vmem_limit),
        ),
    )(logits, targets_2d)

    # per-batch-tile partial sums -> mean over the batch (torch default reduction)
    return jnp.sum(out[:, 0, 0]) / jnp.float32(B)


def _reference_loss(logits, targets):
    log_probs = jax.nn.log_softmax(logits.astype(jnp.float32), axis=-1)
    return -jnp.mean(jnp.take_along_axis(log_probs, targets[:, None], axis=1))


if __name__ == "__main__":
    key = jax.random.PRNGKey(0)

    # Small classifier-head example: batch=16, num_classes=32.
    k1, k2, k3, k4 = jax.random.split(key, 4)
    B, C = 16, 32
    logits = jax.random.normal(k1, (B, C), dtype=jnp.float32)
    targets = jax.random.randint(k2, (B,), 0, C, dtype=jnp.int32)

    loss = jax.block_until_ready(softmax_loss_second_part(logits, targets))
    ref = _reference_loss(logits, targets)
    assert jnp.allclose(loss, ref, atol=1e-5, rtol=1e-5), (loss, ref)

    # Second config exercising class chunking + tail masking on both axes
    # (B=13 not a multiple of the batch tile, C=300 split into 128-wide chunks).
    B2, C2 = 13, 300
    logits2 = jax.random.normal(k3, (B2, C2), dtype=jnp.float32)
    targets2 = jax.random.randint(k4, (B2,), 0, C2, dtype=jnp.int32)
    loss2 = jax.block_until_ready(
        softmax_loss_second_part(logits2, targets2, max_tile_c=128, max_tile_b=8))
    ref2 = _reference_loss(logits2, targets2)
    assert jnp.allclose(loss2, ref2, atol=1e-5, rtol=1e-5), (loss2, ref2)

    # TODO(synk): debug=True branch (boolean-mask extraction of intra/inter
    # logits yields data-dependent shapes) has no clean Pallas equivalent.
    print("KERNEL_OK")
</pallas_src>

<mosaic_0001>
module attributes {stable_mosaic.version = 11 : i64} {
  func.func @_ce_partial_kernel(%arg0: i32, %arg1: i32, %arg2: memref<16x32xf32, #tpu.memory_space<vmem>>, %arg3: memref<16x1xi32, #tpu.memory_space<vmem>>, %arg4: memref<1x8x128xf32, #tpu.memory_space<vmem>>, %arg5: memref<16x1xf32, #tpu.memory_space<vmem>>, %arg6: memref<16x1xf32, #tpu.memory_space<vmem>>, %arg7: memref<16x1xf32, #tpu.memory_space<vmem>>) attributes {dimension_semantics = [#tpu.dimension_semantics<parallel>, #tpu.dimension_semantics<arbitrary>], iteration_bounds = array<i64: 1, 1>, scalar_prefetch = 0 : i64, scratch_operands = 3 : i64, tpu.core_type = #tpu.core_type<tc>, window_params = [{transform_indices = @transform_0, window_bounds = array<i64: 16, 32>}, {transform_indices = @transform_1, window_bounds = array<i64: 16, 1>}, {transform_indices = @transform_2, window_bounds = array<i64: 1, 8, 128>}]} {
    %c0_i32 = arith.constant 0 : i32
    %0 = arith.cmpi eq, %arg1, %c0_i32 : i32
    %1 = arith.extui %0 : i1 to i32
    %c0_i32_0 = arith.constant 0 : i32
    %2 = arith.cmpi ne, %1, %c0_i32_0 : i32
    scf.if %2 {
      %cst_23 = arith.constant 0xFF800000 : f32
      %44 = vector.broadcast %cst_23 : f32 to vector<16x1xf32>
      %c0_24 = arith.constant 0 : index
      %c0_25 = arith.constant 0 : index
      %45 = vector.load %arg5[%c0_24, %c0_25] : memref<16x1xf32, #tpu.memory_space<vmem>>, vector<16x1xf32>
      tpu.vector_store %arg5[%c0_24, %c0_25], %44 {strides = array<i32>} : memref<16x1xf32, #tpu.memory_space<vmem>>, vector<16x1xf32>,
      %cst_26 = arith.constant 0.000000e+00 : f32
      %46 = vector.broadcast %cst_26 : f32 to vector<16x1xf32>
      %c0_27 = arith.constant 0 : index
      %c0_28 = arith.constant 0 : index
      %47 = vector.load %arg6[%c0_27, %c0_28] : memref<16x1xf32, #tpu.memory_space<vmem>>, vector<16x1xf32>
      tpu.vector_store %arg6[%c0_27, %c0_28], %46 {strides = array<i32>} : memref<16x1xf32, #tpu.memory_space<vmem>>, vector<16x1xf32>,
      %cst_29 = arith.constant 0.000000e+00 : f32
      %48 = vector.broadcast %cst_29 : f32 to vector<16x1xf32>
      %c0_30 = arith.constant 0 : index
      %c0_31 = arith.constant 0 : index
      %49 = vector.load %arg7[%c0_30, %c0_31] : memref<16x1xf32, #tpu.memory_space<vmem>>, vector<16x1xf32>
      tpu.vector_store %arg7[%c0_30, %c0_31], %48 {strides = array<i32>} : memref<16x1xf32, #tpu.memory_space<vmem>>, vector<16x1xf32>,
    } else {
    }
    %c0 = arith.constant 0 : index
    %c0_1 = arith.constant 0 : index
    %3 = vector.load %arg2[%c0, %c0_1] : memref<16x32xf32, #tpu.memory_space<vmem>>, vector<16x32xf32>
    %c0_2 = arith.constant 0 : index
    %c0_3 = arith.constant 0 : index
    %4 = vector.load %arg3[%c0_2, %c0_3] : memref<16x1xi32, #tpu.memory_space<vmem>>, vector<16x1xi32>
    %5 = tpu.iota {dimensions = array<i32: 1>} : vector<1x32xi32>
    %c32_i32 = arith.constant 32 : i32
    %6 = arith.muli %arg1, %c32_i32 : i32
    %7 = vector.broadcast %6 : i32 to vector<1x32xi32>
    %8 = arith.addi %5, %7 : vector<1x32xi32>
    %c32_i32_4 = arith.constant 32 : i32
    %9 = vector.broadcast %c32_i32_4 : i32 to vector<1x32xi32>
    %10 = arith.cmpi slt, %8, %9 : vector<1x32xi32>
    %cst = arith.constant 0xFF800000 : f32
    %11 = vector.shape_cast %10 : vector<1x32xi1> to vector<1x32xi1>
    %12 = vector.broadcast %11 : vector<1x32xi1> to vector<16x32xi1>
    %13 = vector.broadcast %cst : f32 to vector<16x32xf32>
    %14 = arith.select %12, %3, %13 : vector<16x32xi1>, vector<16x32xf32>
    %c0_5 = arith.constant 0 : index
    %c0_6 = arith.constant 0 : index
    %15 = vector.load %arg5[%c0_5, %c0_6] : memref<16x1xf32, #tpu.memory_space<vmem>>, vector<16x1xf32>
    %cst_7 = arith.constant dense<0xFF800000> : vector<16xf32>
    %16 = vector.multi_reduction <maximumf>, %14, %cst_7 [1] : vector<16x32xf32> to vector<16xf32>
    %17 = vector.shape_cast %16 : vector<16xf32> to vector<16x1xf32>
    %18 = arith.maximumf %15, %17 : vector<16x1xf32>
    %c0_8 = arith.constant 0 : index
    %c0_9 = arith.constant 0 : index
    %19 = vector.load %arg6[%c0_8, %c0_9] : memref<16x1xf32, #tpu.memory_space<vmem>>, vector<16x1xf32>
    %20 = arith.subf %15, %18 : vector<16x1xf32>
    %21 = math.exp %20 : vector<16x1xf32>
    %22 = arith.mulf %19, %21 : vector<16x1xf32>
    %23 = vector.broadcast %18 : vector<16x1xf32> to vector<16x32xf32>
    %24 = arith.subf %14, %23 : vector<16x32xf32>
    %25 = math.exp %24 : vector<16x32xf32>
    %cst_10 = arith.constant dense<0.000000e+00> : vector<16xf32>
    %26 = vector.multi_reduction <add>, %25, %cst_10 [1] : vector<16x32xf32> to vector<16xf32>
    %27 = vector.shape_cast %26 : vector<16xf32> to vector<16x1xf32>
    %28 = arith.addf %22, %27 : vector<16x1xf32>
    %c0_11 = arith.constant 0 : index
    %c0_12 = arith.constant 0 : index
    %29 = vector.load %arg6[%c0_11, %c0_12] : memref<16x1xf32, #tpu.memory_space<vmem>>, vector<16x1xf32>
    tpu.vector_store %arg6[%c0_11, %c0_12], %28 {strides = array<i32>} : memref<16x1xf32, #tpu.memory_space<vmem>>, vector<16x1xf32>,
    %c0_13 = arith.constant 0 : index
    %c0_14 = arith.constant 0 : index
    %30 = vector.load %arg5[%c0_13, %c0_14] : memref<16x1xf32, #tpu.memory_space<vmem>>, vector<16x1xf32>
    tpu.vector_store %arg5[%c0_13, %c0_14], %18 {strides = array<i32>} : memref<16x1xf32, #tpu.memory_space<vmem>>, vector<16x1xf32>,
    %c0_15 = arith.constant 0 : index
    %c0_16 = arith.constant 0 : index
    %31 = vector.load %arg7[%c0_15, %c0_16] : memref<16x1xf32, #tpu.memory_space<vmem>>, vector<16x1xf32>
    %32 = vector.broadcast %8 : vector<1x32xi32> to vector<16x32xi32>
    %33 = vector.broadcast %4 : vector<16x1xi32> to vector<16x32xi32>
    %34 = arith.cmpi eq, %32, %33 : vector<16x32xi32>
    %cst_17 = arith.constant 0.000000e+00 : f32
    %35 = vector.broadcast %cst_17 : f32 to vector<16x32xf32>
    %36 = arith.select %34, %3, %35 : vector<16x32xi1>, vector<16x32xf32>
    %cst_18 = arith.constant dense<0.000000e+00> : vector<16xf32>
    %37 = vector.multi_reduction <add>, %36, %cst_18 [1] : vector<16x32xf32> to vector<16xf32>
    %38 = vector.shape_cast %37 : vector<16xf32> to vector<16x1xf32>
    %39 = arith.addf %31, %38 : vector<16x1xf32>
    %c0_19 = arith.constant 0 : index
    %c0_20 = arith.constant 0 : index
    %40 = vector.load %arg7[%c0_19, %c0_20] : memref<16x1xf32, #tpu.memory_space<vmem>>, vector<16x1xf32>
    tpu.vector_store %arg7[%c0_19, %c0_20], %39 {strides = array<i32>} : memref<16x1xf32, #tpu.memory_space<vmem>>, vector<16x1xf32>,
    %c0_i32_21 = arith.constant 0 : i32
    %41 = arith.cmpi eq, %arg1, %c0_i32_21 : i32
    %42 = arith.extui %41 : i1 to i32
    %c0_i32_22 = arith.constant 0 : i32
    %43 = arith.cmpi ne, %42, %c0_i32_22 : i32
    scf.if %43 {
      %c0_23 = arith.constant 0 : index
      %c0_24 = arith.constant 0 : index
      %44 = vector.load %arg5[%c0_23, %c0_24] : memref<16x1xf32, #tpu.memory_space<vmem>>, vector<16x1xf32>
      %c0_25 = arith.constant 0 : index
      %c0_26 = arith.constant 0 : index
      %45 = vector.load %arg6[%c0_25, %c0_26] : memref<16x1xf32, #tpu.memory_space<vmem>>, vector<16x1xf32>
      %46 = math.log %45 : vector<16x1xf32>
      %47 = arith.addf %44, %46 : vector<16x1xf32>
      %c0_27 = arith.constant 0 : index
      %c0_28 = arith.constant 0 : index
      %48 = vector.load %arg7[%c0_27, %c0_28] : memref<16x1xf32, #tpu.memory_space<vmem>>, vector<16x1xf32>
      %49 = arith.subf %47, %48 : vector<16x1xf32>
      %c16_i32 = arith.constant 16 : i32
      %50 = arith.muli %arg0, %c16_i32 : i32
      %51 = tpu.iota {dimensions = array<i32: 0>} : vector<16x1xi32>
      %52 = vector.broadcast %50 : i32 to vector<16x1xi32>
      %53 = arith.addi %52, %51 : vector<16x1xi32>
      %c16_i32_29 = arith.constant 16 : i32
      %54 = vector.broadcast %c16_i32_29 : i32 to vector<16x1xi32>
      %55 = arith.cmpi slt, %53, %54 : vector<16x1xi32>
      %cst_30 = arith.constant 0.000000e+00 : f32
      %56 = vector.broadcast %cst_30 : f32 to vector<16x1xf32>
      %57 = arith.select %55, %49, %56 : vector<16x1xi1>, vector<16x1xf32>
      %58 = vector.shape_cast %57 : vector<16x1xf32> to vector<1x16x1xf32>
      %cst_31 = arith.constant dense<0.000000e+00> : vector<1xf32>
      %59 = vector.multi_reduction <add>, %58, %cst_31 [1, 2] : vector<1x16x1xf32> to vector<1xf32>
      %60 = vector.shape_cast %59 : vector<1xf32> to vector<1x1x1xf32>
      %61 = vector.extract %60[0, 0, 0] : f32 from vector<1x1x1xf32>
      %62 = vector.broadcast %61 : f32 to vector<1x8x128xf32>
      %c0_32 = arith.constant 0 : index
      %c0_33 = arith.constant 0 : index
      %c0_34 = arith.constant 0 : index
      %63 = vector.load %arg4[%c0_32, %c0_33, %c0_34] : memref<1x8x128xf32, #tpu.memory_space<vmem>>, vector<1x8x128xf32>
      tpu.vector_store %arg4[%c0_32, %c0_33, %c0_34], %62 {strides = array<i32>} : memref<1x8x128xf32, #tpu.memory_space<vmem>>, vector<1x8x128xf32>,
    } else {
    }
    return
  }
  func.func @transform_0(%arg0: i32, %arg1: i32) -> (i32, i32) {
    %c0_i32 = arith.constant 0 : i32
    return %arg0, %arg1 : i32, i32
  }
  func.func @transform_1(%arg0: i32, %arg1: i32) -> (i32, i32) {
    %c0_i32 = arith.constant 0 : i32
    %c0_i32_0 = arith.constant 0 : i32
    return %arg0, %c0_i32 : i32, i32
  }
  func.func @transform_2(%arg0: i32, %arg1: i32) -> (i32, i32, i32) {
    %c0_i32 = arith.constant 0 : i32
    %c0_i32_0 = arith.constant 0 : i32
    %c0_i32_1 = arith.constant 0 : i32
    return %arg0, %c0_i32, %c0_i32_0 : i32, i32, i32
  }
}

</mosaic_0001>

<llo_original>
// kernel: tpu_custom_call.1
$region0: #{tpu_custom_call.1}
  #allocation0 [shape = 'u32[]', space=smem, size = 0x4, offset = 0x4, fixed_abs, tag = 'smem constant byte address 0x4 - core index']
  #allocation1 [shape = 'u32[144,128]{1,0:T(1,128)}', space=vmem, size = 0x12000, scoped, tag = 'internal scratch']
  #allocation2 [shape = 'f32[16,1]{1,0:T(8,128)}', space=vmem, size = 0x2000, scoped, tag = 'scratch operand']
  #allocation3 [shape = 'f32[16,1]{1,0:T(8,128)}', space=vmem, size = 0x2000, scoped, tag = 'scratch operand']
  #allocation4 [shape = 'f32[16,1]{1,0:T(8,128)}', space=vmem, size = 0x2000, scoped, tag = 'scratch operand']
  %s0 = inlined_call_operand.vmem [shape: f32[16,32], index: 0, kind: input, shape index: {}]
  %s1 = inlined_call_operand.vmem [shape: s32[16,1], index: 1, kind: input, shape index: {}]
  %s2 = inlined_call_operand.hbm [shape: f32[1,8,128], index: 2, kind: output, shape index: {}]
  %s3 = sld [smem:[#allocation0]]
  $region26: #{tpu_custom_call.1} parent=0
    _
  %s5 = ssub.s32 1, %s3
  %s6 = scalar_select 0, %s5, %s3
  $region1: #{tpu_custom_call.1} parent=0
    #allocation5 [shape = 'u8[4096]{0}', space=vmem, size = 0x1000, scoped, tag = 'output window, operand 0, single buffered']
    #allocation6 [shape = 's32[1]{0}', space=sflag, size = 0x4, scoped, tag = 'scoped memory for tpu_custom_call.1']
    %7 = vsyncpa [#allocation6], 0
    // Predicated region
    $region2: #{tpu_custom_call.1} parent=1 // pred_check
      _
    $region3: #{tpu_custom_call.1} parent=1 // pred_check_branch
      %9 = sbr.rel (0) target = $region5
    $region4: #{tpu_custom_call.1} parent=1 // pred_region
      _
    $region5: #{tpu_custom_call.1} parent=1 // pred_fallthru
      _
    // Predicated region
    $region6: #{tpu_custom_call.1} parent=1 // pred_check
      _
    $region7: #{tpu_custom_call.1} parent=1 // pred_check_branch
      %11 = sbr.rel (0) target = $region9
    $region8: #{tpu_custom_call.1} parent=1 // pred_region
      _
    $region9: #{tpu_custom_call.1} parent=1 // pred_fallthru
      _
    %p12 = scmp.eq.s32.totalorder 0, 0
    // Predicated region
    $region10: #{tpu_custom_call.1} parent=1 // pred_check
      %p13 = pneg %p12
    $region11: #{tpu_custom_call.1} parent=1 // pred_check_branch
      %15 = sbr.rel (%p13) target = $region13
    $region12: #{tpu_custom_call.1} parent=1 // pred_region
      %vm16 = vcmask 7168
      %17 = vst.msk [vmem:[#allocation2] sm:$0xff] %vm16, -inf
      %18 = vst.msk [vmem:[#allocation2 + $0x8] sm:$0xff] %vm16, -inf
      %19 = vst.msk [vmem:[#allocation3] sm:$0xff] %vm16, 0.0
      %20 = vst.msk [vmem:[#allocation3 + $0x8] sm:$0xff] %vm16, 0.0
      %21 = vst.msk [vmem:[#allocation4] sm:$0xff] %vm16, 0.0
      %22 = vst.msk [vmem:[#allocation4 + $0x8] sm:$0xff] %vm16, 0.0
    $region13: #{tpu_custom_call.1} parent=1 // pred_fallthru
      _
    %v23 = vld [vmem:[%s0] sm:$0xff]
    %v24 = vld [vmem:[%s0 + $0x8] sm:$0xff]
    %v25 = vld [vmem:[%s1] sm:$0xff]
    %v26 = vld [vmem:[%s1 + $0x8] sm:$0xff]
    %v27 = vlaneseq
    %v28 = vand.u32 %v27, 127
    %s29 = smul.u32 0, 32
    %v30 = vstv %s29
    %v31 = vadd.s32 %v28, %v30
    %vm32 = vcmp.lt.s32.totalorder %v31, 32
    %v33 = vsel %vm32, 1, 0
    %vm34 = vcmp.eq.s32.totalorder %v33, 1
    %v35 = vsel %vm34, %v23, -inf
    %v36 = vsel %vm34, %v24, -inf
    %v37 = vld [vmem:[#allocation2] sm:$0xff]
    %v38 = vld [vmem:[#allocation2 + $0x8] sm:$0xff]
    %vm39 = vcmask 261120
    %v40 = vsel %vm39, %v35, -inf
    %41 = vmax.xlane.f32.xlu0 %v40
    %v42 = vpop.xlane.xlu0 %41
    %v43 = vsel %vm39, %v36, -inf
    %44 = vmax.xlane.f32.xlu0 %v43
    %v45 = vpop.xlane.xlu0 %44
    %v46 = vmax.f32 %v37, %v42
    %v47 = vmax.f32 %v38, %v45
    %v48 = vld [vmem:[#allocation3] sm:$0xff]
    %v49 = vld [vmem:[#allocation3 + $0x8] sm:$0xff]
    %v50 = vsub.f32 %v37, %v46
    %v51 = vsub.f32 %v38, %v47
    %v52 = vmul.f32 %v50, 1.442695
    %v53 = vpow.pop %v52
    %v54 = vmul.f32 %v51, 1.442695
    %v55 = vpow.pop %v54
    %v56 = vmul.f32 %v48, %v53
    %v57 = vmul.f32 %v49, %v55
    %59 = vset.pattern.permute.xlu0 0
    %60 = vperm.xlu0 %59, %v46
    %v61 = vpop.permute.xlu0 %60
    %64 = vset.pattern.permute.xlu0 0
    %65 = vperm.xlu0 %64, %v47
    %v66 = vpop.permute.xlu0 %65
    %v68 = vsub.f32 %v35, %v61
    %v69 = vsub.f32 %v36, %v66
    %v70 = vmul.f32 %v68, 1.442695
    %v71 = vpow.pop %v70
    %v72 = vmul.f32 %v69, 1.442695
    %v73 = vpow.pop %v72
    %v74 = vsel %vm39, %v71, 0.0
    %75 = vadd.xlane.f32.xlu0 %v74
    %v76 = vpop.xlane.xlu0 %75
    %v77 = vsel %vm39, %v73, 0.0
    %78 = vadd.xlane.f32.xlu0 %v77
    %v79 = vpop.xlane.xlu0 %78
    %v80 = vadd.f32 %v56, %v76
    %v81 = vadd.f32 %v57, %v79
    %vm82 = vcmask 7168
    %83 = vst.msk [vmem:[#allocation3] sm:$0xff] %vm82, %v80
    %84 = vst.msk [vmem:[#allocation3 + $0x8] sm:$0xff] %vm82, %v81
    %85 = vst.msk [vmem:[#allocation2] sm:$0xff] %vm82, %v46
    %86 = vst.msk [vmem:[#allocation2 + $0x8] sm:$0xff] %vm82, %v47
    %v87 = vld [vmem:[#allocation4] sm:$0xff]
    %v88 = vld [vmem:[#allocation4 + $0x8] sm:$0xff]
    %89 = vset.pattern.permute.xlu0 0
    %90 = vperm.xlu0 %89, %v25
    %v91 = vpop.permute.xlu0 %90
    %92 = vset.pattern.permute.xlu0 0
    %93 = vperm.xlu0 %92, %v26
    %v94 = vpop.permute.xlu0 %93
    %vm95 = vcmp.eq.s32.totalorder %v31, %v91
    %vm96 = vcmp.eq.s32.totalorder %v31, %v94
    %v97 = vsel %vm95, %v23, 0.0
    %v98 = vsel %vm96, %v24, 0.0
    %v99 = vsel %vm39, %v97, 0.0
    %100 = vadd.xlane.f32.xlu0 %v99
    %v101 = vpop.xlane.xlu0 %100
    %v102 = vsel %vm39, %v98, 0.0
    %103 = vadd.xlane.f32.xlu0 %v102
    %v104 = vpop.xlane.xlu0 %103
    %v105 = vadd.f32 %v87, %v101
    %v106 = vadd.f32 %v88, %v104
    %107 = vst.msk [vmem:[#allocation4] sm:$0xff] %vm82, %v105
    %108 = vst.msk [vmem:[#allocation4 + $0x8] sm:$0xff] %vm82, %v106
    // Predicated region
    $region14: #{tpu_custom_call.1} parent=1 // pred_check
      %p109 = pneg %p12
    $region15: #{tpu_custom_call.1} parent=1 // pred_check_branch
      %111 = sbr.rel (%p109) target = $region17
    $region16: #{tpu_custom_call.1} parent=1 // pred_region
      %v112 = vld [vmem:[#allocation2] sm:$0xff]
      %v113 = vld [vmem:[#allocation2 + $0x8] sm:$0xff]
      %v114 = vld [vmem:[#allocation3] sm:$0xff]
      %v115 = vld [vmem:[#allocation3 + $0x8] sm:$0xff]
      %v116 = vlog2.pop %v114
      %v117 = vmul.f32 %v116, 0.6931472
      %v118 = vlog2.pop %v115
      %v119 = vmul.f32 %v118, 0.6931472
      %v120 = vadd.f32 %v112, %v117
      %v121 = vadd.f32 %v113, %v119
      %v122 = vld [vmem:[#allocation4] sm:$0xff]
      %v123 = vld [vmem:[#allocation4 + $0x8] sm:$0xff]
      %v124 = vsub.f32 %v120, %v122
      %v125 = vsub.f32 %v121, %v123
      %s126 = smul.u32 0, 16
      %v127 = vlaneseq
      %v128 = vshrl.u32 %v127, 7
      %v129 = vadd.s32 %v128, 8
      %v130 = vstv %s126
      %v131 = vadd.s32 %v130, %v128
      %v132 = vadd.s32 %v130, %v129
      %vm133 = vcmp.lt.s32.totalorder %v131, 16
      %vm134 = vcmp.lt.s32.totalorder %v132, 16
      %v135 = vsel %vm133, %v124, 0.0
      %v136 = vsel %vm134, %v125, 0.0
      %v137 = vsel %vm82, %v135, 0.0
      %v138 = vsel %vm82, %v136, 0.0
      %v139 = vadd.f32 %v137, %v138
      %140 = vadd.xlane.f32.xlu0 %v139
      %v141 = vpop.xlane.xlu0 %140
      %v142 = vrot.slane %v141, 4
      %v143 = vadd.f32 %v141, %v142
      %v144 = vrot.slane %v143, 2
      %v145 = vadd.f32 %v143, %v144
      %v146 = vrot.slane %v145, 1
      %v147 = vadd.f32 %v145, %v146
      %s148 = vtos %v147
      %v149 = vstv %s148
      %150 = vst [vmem:[#allocation5] sm:$0xff] %v149
    $region17: #{tpu_custom_call.1} parent=1 // pred_fallthru
      _
    // Predicated region
    $region18: #{tpu_custom_call.1} parent=1 // pred_check
      _
    $region19: #{tpu_custom_call.1} parent=1 // pred_check_branch
      %152 = sbr.rel (0) target = $region21
    $region20: #{tpu_custom_call.1} parent=1 // pred_region
      %s154 = ssub.s32 128, 128
      %155 = vsyncadd [#allocation6], %s154
      %s157 = sshll.u32 [#allocation5], 4
      %s158 = int_to_ptr.vmem [resolvable:$true] %s157
      %160 = dma.vmem_to_hbm [thread:$0]  %s158, 128, %s2, [#allocation6]
    $region21: #{tpu_custom_call.1} parent=1 // pred_fallthru
      _
    // Predicated region
    $region22: #{tpu_custom_call.1} parent=1 // pred_check
      _
    $region23: #{tpu_custom_call.1} parent=1 // pred_check_branch
      %162 = sbr.rel (0) target = $region25
    $region24: #{tpu_custom_call.1} parent=1 // pred_region
      %163 = dma.done [#allocation6], 128
    $region25: #{tpu_custom_call.1} parent=1 // pred_fallthru
      _
    %164 = vsyncpa [#allocation6], 1

</llo_original>
